<compile_context>
chip_gen: v7x
topology: tpu7x:2x2x1
jax: 0.10.0
libtpu: 0.0.40
codegen_flags: <defaults>
</compile_context>

<pallas_src>
import functools

import jax
import jax.numpy as jnp
from jax.experimental import pallas as pl
from jax.experimental.pallas import tpu as pltpu

LANE = 128
SUBLANE = 8
_PREC = jax.lax.Precision.DEFAULT  # perf review: HIGHEST binds the MXU on v5e


def _round_up(n, m):
    return ((n + m - 1) // m) * m


def _pad2(a, rows, cols):
    r, c = a.shape
    return jnp.pad(a, ((0, rows - r), (0, cols - c)))


def _pick_tm(b):
    """Batch tile: large for per-step-overhead amortization, bounded tail waste."""
    if b <= 1024:
        return _round_up(max(b, SUBLANE), SUBLANE)  # one tile, <= 7 pad rows
    for cand in (1024, 512, 256):
        if (_round_up(b, cand) - b) * 8 <= b:       # tail waste <= 12.5 %
            return cand
    return 256


def _mm(a, w_ref):
    """MXU matmul, f32 accumulation; only lhs is cast to the weight dtype."""
    return jnp.dot(a.astype(w_ref.dtype), w_ref[...],
                   preferred_element_type=jnp.float32, precision=_PREC)


def cdae_kernel(inp_ref,
                w_ne1_ref, b_ne1_ref, w_ne2_ref, b_ne2_ref,
                w_e1i_ref, w_e1n_ref, b_e1_ref,
                w_e2_ref, b_e2_ref,
                w_d1c_ref, w_d1i_ref, w_d1n_ref, b_d1_ref,
                w_d2_ref, b_d2_ref,
                comb_ref,
                *, nl_col):
    inp = inp_ref[...]                                   # (TM, INP) packed slab

    # noise_embed: Linear(1, ne) -> ReLU -> Linear(ne, ne)
    # First Linear has one useful contraction row -> VPU broadcast, no MXU op.
    nl = inp[:, nl_col:nl_col + 1]                       # (TM, 1)
    ne = jnp.maximum(nl * w_ne1_ref[...] + b_ne1_ref[...], 0.0)
    ne = _mm(ne, w_ne2_ref) + b_ne2_ref[...]

    # encoder: Linear(cat[x, y, ne]) -> ReLU -> Linear -> ReLU
    h = jnp.maximum(_mm(inp, w_e1i_ref) + _mm(ne, w_e1n_ref) + b_e1_ref[...],
                    0.0)
    # latent lands pre-shifted at lanes [out_dim, out_dim+latent_dim).
    latent_slab = jnp.maximum(_mm(h, w_e2_ref) + b_e2_ref[...], 0.0)

    # decoder: Linear(cat[latent, x, ne]) -> ReLU -> Linear
    d = jnp.maximum(_mm(latent_slab, w_d1c_ref) + _mm(inp, w_d1i_ref)
                    + _mm(ne, w_d1n_ref) + b_d1_ref[...], 0.0)
    out_slab = _mm(d, w_d2_ref) + b_d2_ref[...]          # lanes [0, out_dim)

    # Disjoint non-zero lanes -> a single lane-dense store covers both outputs.
    comb_ref[...] = (out_slab + latent_slab).astype(comb_ref.dtype)


def make_cdae(x_dim, y_dim, hidden_dim=128, latent_dim=64, noise_embed_dim=16):
    out_dim = x_dim + y_dim
    xy = x_dim + y_dim
    nl_col = xy                                    # noise_level column in slab
    INP = _round_up(xy + 1, LANE)                  # packed input slab width
    NP = _round_up(noise_embed_dim, LANE)
    HP = _round_up(hidden_dim, LANE)
    CP = _round_up(out_dim + latent_dim, LANE)     # combined output slab width

    def prepare_params(params):
        """Split / shift / zero-pad weights once (outside the hot path)."""
        (w_ne1, b_ne1, w_ne2, b_ne2,
         w_e1, b_e1, w_e2, b_e2,
         w_d1, b_d1, w_d2, b_d2) = [jnp.asarray(p, jnp.float32) for p in params]

        w_ne1_p = _pad2(w_ne1.reshape(1, noise_embed_dim), 1, NP)
        b_ne1_p = _pad2(b_ne1.reshape(1, -1), 1, NP)
        w_ne2_p = _pad2(w_ne2, NP, NP)
        b_ne2_p = _pad2(b_ne2.reshape(1, -1), 1, NP)

        # encoder first layer: [x | y] rows of the packed slab + ne segment.
        # (nl row and padding rows stay zero -> padded lanes contribute 0.)
        w_e1i_p = _pad2(w_e1[:xy], INP, HP)
        w_e1n_p = _pad2(w_e1[xy:], NP, HP)
        b_e1_p = _pad2(b_e1.reshape(1, -1), 1, HP)

        # encoder second layer: columns shifted so latent lands at lanes
        # [out_dim, out_dim+latent_dim) of the combined output slab.
        w_e2_p = jnp.zeros((HP, CP), jnp.float32).at[
            :hidden_dim, out_dim:out_dim + latent_dim].set(w_e2)
        b_e2_p = jnp.zeros((1, CP), jnp.float32).at[
            0, out_dim:out_dim + latent_dim].set(b_e2)

        # decoder first layer: latent (shifted rows), x (from packed slab), ne.
        w_d1c_p = jnp.zeros((CP, HP), jnp.float32).at[
            out_dim:out_dim + latent_dim, :hidden_dim].set(w_d1[:latent_dim])
        w_d1i_p = _pad2(w_d1[latent_dim:latent_dim + x_dim], INP, HP)
        w_d1n_p = _pad2(w_d1[latent_dim + x_dim:], NP, HP)
        b_d1_p = _pad2(b_d1.reshape(1, -1), 1, HP)

        # decoder second layer: out lands at lanes [0, out_dim).
        w_d2_p = _pad2(w_d2, HP, CP)
        b_d2_p = _pad2(b_d2.reshape(1, -1), 1, CP)

        return (w_ne1_p, b_ne1_p, w_ne2_p, b_ne2_p,
                w_e1i_p, w_e1n_p, b_e1_p, w_e2_p, b_e2_p,
                w_d1c_p, w_d1i_p, w_d1n_p, b_d1_p, w_d2_p, b_d2_p)

    @jax.jit
    def forward(x, y_noisy, noise_level, prepped):
        B = x.shape[0]
        TM = _pick_tm(B)
        BP = _round_up(B, TM)
        grid = (BP // TM,)

        # Pack the three streamed inputs into one lane-dense slab (padded rows
        # and lanes stay exactly zero through every layer: matching weight
        # rows/cols and biases are zero).
        inp = jnp.concatenate(
            [x, y_noisy, noise_level.reshape(B, 1)], axis=1).astype(jnp.float32)
        inp_p = jnp.pad(inp, ((0, BP - B), (0, INP - (xy + 1))))

        def _stream(cols):
            return pl.BlockSpec((TM, cols), lambda i: (i, 0))

        def _res(a):  # weights/biases resident in VMEM across all batch tiles
            # TODO(synk): on v7x with large hidden dims, add
            # pipeline_mode=pl.Buffered(1) to single-buffer residents.
            return pl.BlockSpec(a.shape, lambda i: (0, 0))

        w_elems = sum(int(a.size) for a in prepped)
        flops = 2 * BP * (
            NP * NP                          # noise_embed second Linear
            + INP * HP + NP * HP             # encoder first Linear
            + HP * CP                        # encoder second Linear
            + CP * HP + INP * HP + NP * HP   # decoder first Linear
            + HP * CP)                       # decoder second Linear
        cost = pl.CostEstimate(
            flops=int(flops), transcendentals=0,
            bytes_accessed=int(4 * (BP * INP + BP * CP + w_elems)))

        vmem_need = 4 * (2 * TM * INP + 2 * TM * CP + 2 * w_elems) + (2 << 20)
        vmem_limit = int(min(max(vmem_need, 16 << 20), 48 << 20))

        comb = pl.pallas_call(
            functools.partial(cdae_kernel, nl_col=nl_col),
            out_shape=jax.ShapeDtypeStruct((BP, CP), x.dtype),
            grid_spec=pltpu.PrefetchScalarGridSpec(
                num_scalar_prefetch=0,
                grid=grid,
                in_specs=[_stream(INP)] + [_res(a) for a in prepped],
                out_specs=pl.BlockSpec((TM, CP), lambda i: (i, 0)),
            ),
            compiler_params=pltpu.CompilerParams(
                # TODO(synk): on v7x use pltpu.CORE_PARALLEL here to shard the
                # batch grid across both TensorCores.
                dimension_semantics=("parallel",),
                vmem_limit_bytes=vmem_limit),
            cost_estimate=cost,
        )(inp_p, *prepped)

        out = comb[:B, :out_dim]
        latent = comb[:B, out_dim:out_dim + latent_dim]
        return out, latent

    return prepare_params, forward


def _linear_init(key, fan_in, fan_out):
    """nn.Linear-style U(-1/sqrt(fan_in), 1/sqrt(fan_in)); W stored (in, out)."""
    kw, kb = jax.random.split(key)
    bound = 1.0 / (fan_in ** 0.5)
    w = jax.random.uniform(kw, (fan_in, fan_out), jnp.float32, -bound, bound)
    b = jax.random.uniform(kb, (fan_out,), jnp.float32, -bound, bound)
    return w, b


def init_params(key, x_dim, y_dim, hidden_dim, latent_dim, noise_embed_dim):
    ks = jax.random.split(key, 6)
    w_ne1, b_ne1 = _linear_init(ks[0], 1, noise_embed_dim)
    w_ne2, b_ne2 = _linear_init(ks[1], noise_embed_dim, noise_embed_dim)
    w_e1, b_e1 = _linear_init(ks[2], x_dim + y_dim + noise_embed_dim, hidden_dim)
    w_e2, b_e2 = _linear_init(ks[3], hidden_dim, latent_dim)
    w_d1, b_d1 = _linear_init(ks[4], latent_dim + x_dim + noise_embed_dim,
                              hidden_dim)
    w_d2, b_d2 = _linear_init(ks[5], hidden_dim, x_dim + y_dim)
    return (w_ne1, b_ne1, w_ne2, b_ne2, w_e1, b_e1, w_e2, b_e2,
            w_d1, b_d1, w_d2, b_d2)


def cdae_reference(x, y_noisy, noise_level, params):
    """Pure-JAX forward, same semantics as the PyTorch module, same precision."""
    (w_ne1, b_ne1, w_ne2, b_ne2,
     w_e1, b_e1, w_e2, b_e2,
     w_d1, b_d1, w_d2, b_d2) = params
    dot = functools.partial(jnp.dot, precision=_PREC)
    ne = jnp.maximum(dot(noise_level, w_ne1) + b_ne1, 0.0)
    ne = dot(ne, w_ne2) + b_ne2
    inp = jnp.concatenate([x, y_noisy, ne], axis=1)
    h = jnp.maximum(dot(inp, w_e1) + b_e1, 0.0)
    latent = jnp.maximum(dot(h, w_e2) + b_e2, 0.0)
    dec_inp = jnp.concatenate([latent, x, ne], axis=1)
    d = jnp.maximum(dot(dec_inp, w_d1) + b_d1, 0.0)
    out = dot(d, w_d2) + b_d2
    return out, latent


if __name__ == "__main__":
    # Small shapes consistent with the module.
    B = 16
    x_dim, y_dim = 6, 4
    hidden_dim, latent_dim, noise_embed_dim = 32, 16, 16

    key = jax.random.PRNGKey(0)
    k_in, k_par = jax.random.split(key)
    kx, ky, kn = jax.random.split(k_in, 3)
    x = jax.random.normal(kx, (B, x_dim), jnp.float32)
    y_noisy = jax.random.normal(ky, (B, y_dim), jnp.float32)
    noise_level = jax.random.uniform(kn, (B, 1), jnp.float32)

    params = init_params(k_par, x_dim, y_dim, hidden_dim, latent_dim,
                         noise_embed_dim)

    prepare_params, cdae_forward = make_cdae(
        x_dim, y_dim, hidden_dim, latent_dim, noise_embed_dim)
    prepped = jax.block_until_ready(prepare_params(params))

    out, latent = jax.block_until_ready(
        cdae_forward(x, y_noisy, noise_level, prepped))

    out_ref, latent_ref = cdae_reference(x, y_noisy, noise_level, params)

    assert out.shape == (B, x_dim + y_dim)
    assert latent.shape == (B, latent_dim)
    assert jnp.allclose(out, out_ref, atol=2e-2, rtol=2e-2), (
        float(jnp.max(jnp.abs(out - out_ref))))
    assert jnp.allclose(latent, latent_ref, atol=2e-2, rtol=2e-2), (
        float(jnp.max(jnp.abs(latent - latent_ref))))

    print("KERNEL_OK")
</pallas_src>

<mosaic_0001>
module attributes {stable_mosaic.version = 11 : i64} {
  func.func @cdae_kernel(%arg0: i32, %arg1: memref<16x128xf32, #tpu.memory_space<vmem>>, %arg2: memref<1x128xf32, #tpu.memory_space<vmem>>, %arg3: memref<1x128xf32, #tpu.memory_space<vmem>>, %arg4: memref<128x128xf32, #tpu.memory_space<vmem>>, %arg5: memref<1x128xf32, #tpu.memory_space<vmem>>, %arg6: memref<128x128xf32, #tpu.memory_space<vmem>>, %arg7: memref<128x128xf32, #tpu.memory_space<vmem>>, %arg8: memref<1x128xf32, #tpu.memory_space<vmem>>, %arg9: memref<128x128xf32, #tpu.memory_space<vmem>>, %arg10: memref<1x128xf32, #tpu.memory_space<vmem>>, %arg11: memref<128x128xf32, #tpu.memory_space<vmem>>, %arg12: memref<128x128xf32, #tpu.memory_space<vmem>>, %arg13: memref<128x128xf32, #tpu.memory_space<vmem>>, %arg14: memref<1x128xf32, #tpu.memory_space<vmem>>, %arg15: memref<128x128xf32, #tpu.memory_space<vmem>>, %arg16: memref<1x128xf32, #tpu.memory_space<vmem>>, %arg17: memref<16x128xf32, #tpu.memory_space<vmem>>) attributes {dimension_semantics = [#tpu.dimension_semantics<parallel>], iteration_bounds = array<i64: 1>, scalar_prefetch = 0 : i64, scratch_operands = 0 : i64, tpu.core_type = #tpu.core_type<tc>, window_params = [{transform_indices = @transform_0, window_bounds = array<i64: 16, 128>}, {pipeline_mode = #tpu.pipeline_mode<synchronous>, transform_indices = @transform_1, window_bounds = array<i64: 1, 128>}, {pipeline_mode = #tpu.pipeline_mode<synchronous>, transform_indices = @transform_2, window_bounds = array<i64: 1, 128>}, {pipeline_mode = #tpu.pipeline_mode<synchronous>, transform_indices = @transform_3, window_bounds = array<i64: 128, 128>}, {pipeline_mode = #tpu.pipeline_mode<synchronous>, transform_indices = @transform_4, window_bounds = array<i64: 1, 128>}, {pipeline_mode = #tpu.pipeline_mode<synchronous>, transform_indices = @transform_5, window_bounds = array<i64: 128, 128>}, {pipeline_mode = #tpu.pipeline_mode<synchronous>, transform_indices = @transform_6, window_bounds = array<i64: 128, 128>}, {pipeline_mode = #tpu.pipeline_mode<synchronous>, transform_indices = @transform_7, window_bounds = array<i64: 1, 128>}, {pipeline_mode = #tpu.pipeline_mode<synchronous>, transform_indices = @transform_8, window_bounds = array<i64: 128, 128>}, {pipeline_mode = #tpu.pipeline_mode<synchronous>, transform_indices = @transform_9, window_bounds = array<i64: 1, 128>}, {pipeline_mode = #tpu.pipeline_mode<synchronous>, transform_indices = @transform_10, window_bounds = array<i64: 128, 128>}, {pipeline_mode = #tpu.pipeline_mode<synchronous>, transform_indices = @transform_11, window_bounds = array<i64: 128, 128>}, {pipeline_mode = #tpu.pipeline_mode<synchronous>, transform_indices = @transform_12, window_bounds = array<i64: 128, 128>}, {pipeline_mode = #tpu.pipeline_mode<synchronous>, transform_indices = @transform_13, window_bounds = array<i64: 1, 128>}, {pipeline_mode = #tpu.pipeline_mode<synchronous>, transform_indices = @transform_14, window_bounds = array<i64: 128, 128>}, {pipeline_mode = #tpu.pipeline_mode<synchronous>, transform_indices = @transform_15, window_bounds = array<i64: 1, 128>}, {transform_indices = @transform_16, window_bounds = array<i64: 16, 128>}]} {
    %c0 = arith.constant 0 : index
    %c0_0 = arith.constant 0 : index
    %0 = vector.load %arg1[%c0, %c0_0] : memref<16x128xf32, #tpu.memory_space<vmem>>, vector<16x128xf32>
    %1 = vector.extract_strided_slice %0 {offsets = [0, 10], sizes = [16, 1], strides = [1, 1]} : vector<16x128xf32> to vector<16x1xf32>
    %c0_1 = arith.constant 0 : index
    %c0_2 = arith.constant 0 : index
    %2 = vector.load %arg2[%c0_1, %c0_2] : memref<1x128xf32, #tpu.memory_space<vmem>>, vector<1x128xf32>
    %3 = vector.broadcast %1 : vector<16x1xf32> to vector<16x128xf32>
    %4 = vector.broadcast %2 : vector<1x128xf32> to vector<16x128xf32>
    %5 = arith.mulf %3, %4 : vector<16x128xf32>
    %c0_3 = arith.constant 0 : index
    %c0_4 = arith.constant 0 : index
    %6 = vector.load %arg3[%c0_3, %c0_4] : memref<1x128xf32, #tpu.memory_space<vmem>>, vector<1x128xf32>
    %7 = vector.broadcast %6 : vector<1x128xf32> to vector<16x128xf32>
    %8 = arith.addf %5, %7 : vector<16x128xf32>
    %cst = arith.constant 0.000000e+00 : f32
    %9 = vector.broadcast %cst : f32 to vector<16x128xf32>
    %10 = arith.maximumf %8, %9 : vector<16x128xf32>
    %c0_5 = arith.constant 0 : index
    %c0_6 = arith.constant 0 : index
    %11 = vector.load %arg4[%c0_5, %c0_6] : memref<128x128xf32, #tpu.memory_space<vmem>>, vector<128x128xf32>
    %cst_7 = arith.constant dense<0.000000e+00> : vector<16x128xf32>
    %12 = tpu.matmul %10, %11, %cst_7 {dimension_numbers = #tpu.dot_dimension_numbers<[1], [0], [0], [1], [0, 0, 1, 1], [], []>} : vector<16x128xf32>, vector<128x128xf32>, vector<16x128xf32> -> vector<16x128xf32>
    %c0_8 = arith.constant 0 : index
    %c0_9 = arith.constant 0 : index
    %13 = vector.load %arg5[%c0_8, %c0_9] : memref<1x128xf32, #tpu.memory_space<vmem>>, vector<1x128xf32>
    %14 = vector.broadcast %13 : vector<1x128xf32> to vector<16x128xf32>
    %15 = arith.addf %12, %14 : vector<16x128xf32>
    %c0_10 = arith.constant 0 : index
    %c0_11 = arith.constant 0 : index
    %16 = vector.load %arg6[%c0_10, %c0_11] : memref<128x128xf32, #tpu.memory_space<vmem>>, vector<128x128xf32>
    %cst_12 = arith.constant dense<0.000000e+00> : vector<16x128xf32>
    %17 = tpu.matmul %0, %16, %cst_12 {dimension_numbers = #tpu.dot_dimension_numbers<[1], [0], [0], [1], [0, 0, 1, 1], [], []>} : vector<16x128xf32>, vector<128x128xf32>, vector<16x128xf32> -> vector<16x128xf32>
    %c0_13 = arith.constant 0 : index
    %c0_14 = arith.constant 0 : index
    %18 = vector.load %arg7[%c0_13, %c0_14] : memref<128x128xf32, #tpu.memory_space<vmem>>, vector<128x128xf32>
    %cst_15 = arith.constant dense<0.000000e+00> : vector<16x128xf32>
    %19 = tpu.matmul %15, %18, %cst_15 {dimension_numbers = #tpu.dot_dimension_numbers<[1], [0], [0], [1], [0, 0, 1, 1], [], []>} : vector<16x128xf32>, vector<128x128xf32>, vector<16x128xf32> -> vector<16x128xf32>
    %20 = arith.addf %17, %19 : vector<16x128xf32>
    %c0_16 = arith.constant 0 : index
    %c0_17 = arith.constant 0 : index
    %21 = vector.load %arg8[%c0_16, %c0_17] : memref<1x128xf32, #tpu.memory_space<vmem>>, vector<1x128xf32>
    %22 = vector.broadcast %21 : vector<1x128xf32> to vector<16x128xf32>
    %23 = arith.addf %20, %22 : vector<16x128xf32>
    %cst_18 = arith.constant 0.000000e+00 : f32
    %24 = vector.broadcast %cst_18 : f32 to vector<16x128xf32>
    %25 = arith.maximumf %23, %24 : vector<16x128xf32>
    %c0_19 = arith.constant 0 : index
    %c0_20 = arith.constant 0 : index
    %26 = vector.load %arg9[%c0_19, %c0_20] : memref<128x128xf32, #tpu.memory_space<vmem>>, vector<128x128xf32>
    %cst_21 = arith.constant dense<0.000000e+00> : vector<16x128xf32>
    %27 = tpu.matmul %25, %26, %cst_21 {dimension_numbers = #tpu.dot_dimension_numbers<[1], [0], [0], [1], [0, 0, 1, 1], [], []>} : vector<16x128xf32>, vector<128x128xf32>, vector<16x128xf32> -> vector<16x128xf32>
    %c0_22 = arith.constant 0 : index
    %c0_23 = arith.constant 0 : index
    %28 = vector.load %arg10[%c0_22, %c0_23] : memref<1x128xf32, #tpu.memory_space<vmem>>, vector<1x128xf32>
    %29 = vector.broadcast %28 : vector<1x128xf32> to vector<16x128xf32>
    %30 = arith.addf %27, %29 : vector<16x128xf32>
    %cst_24 = arith.constant 0.000000e+00 : f32
    %31 = vector.broadcast %cst_24 : f32 to vector<16x128xf32>
    %32 = arith.maximumf %30, %31 : vector<16x128xf32>
    %c0_25 = arith.constant 0 : index
    %c0_26 = arith.constant 0 : index
    %33 = vector.load %arg11[%c0_25, %c0_26] : memref<128x128xf32, #tpu.memory_space<vmem>>, vector<128x128xf32>
    %cst_27 = arith.constant dense<0.000000e+00> : vector<16x128xf32>
    %34 = tpu.matmul %32, %33, %cst_27 {dimension_numbers = #tpu.dot_dimension_numbers<[1], [0], [0], [1], [0, 0, 1, 1], [], []>} : vector<16x128xf32>, vector<128x128xf32>, vector<16x128xf32> -> vector<16x128xf32>
    %c0_28 = arith.constant 0 : index
    %c0_29 = arith.constant 0 : index
    %35 = vector.load %arg12[%c0_28, %c0_29] : memref<128x128xf32, #tpu.memory_space<vmem>>, vector<128x128xf32>
    %cst_30 = arith.constant dense<0.000000e+00> : vector<16x128xf32>
    %36 = tpu.matmul %0, %35, %cst_30 {dimension_numbers = #tpu.dot_dimension_numbers<[1], [0], [0], [1], [0, 0, 1, 1], [], []>} : vector<16x128xf32>, vector<128x128xf32>, vector<16x128xf32> -> vector<16x128xf32>
    %37 = arith.addf %34, %36 : vector<16x128xf32>
    %c0_31 = arith.constant 0 : index
    %c0_32 = arith.constant 0 : index
    %38 = vector.load %arg13[%c0_31, %c0_32] : memref<128x128xf32, #tpu.memory_space<vmem>>, vector<128x128xf32>
    %cst_33 = arith.constant dense<0.000000e+00> : vector<16x128xf32>
    %39 = tpu.matmul %15, %38, %cst_33 {dimension_numbers = #tpu.dot_dimension_numbers<[1], [0], [0], [1], [0, 0, 1, 1], [], []>} : vector<16x128xf32>, vector<128x128xf32>, vector<16x128xf32> -> vector<16x128xf32>
    %40 = arith.addf %37, %39 : vector<16x128xf32>
    %c0_34 = arith.constant 0 : index
    %c0_35 = arith.constant 0 : index
    %41 = vector.load %arg14[%c0_34, %c0_35] : memref<1x128xf32, #tpu.memory_space<vmem>>, vector<1x128xf32>
    %42 = vector.broadcast %41 : vector<1x128xf32> to vector<16x128xf32>
    %43 = arith.addf %40, %42 : vector<16x128xf32>
    %cst_36 = arith.constant 0.000000e+00 : f32
    %44 = vector.broadcast %cst_36 : f32 to vector<16x128xf32>
    %45 = arith.maximumf %43, %44 : vector<16x128xf32>
    %c0_37 = arith.constant 0 : index
    %c0_38 = arith.constant 0 : index
    %46 = vector.load %arg15[%c0_37, %c0_38] : memref<128x128xf32, #tpu.memory_space<vmem>>, vector<128x128xf32>
    %cst_39 = arith.constant dense<0.000000e+00> : vector<16x128xf32>
    %47 = tpu.matmul %45, %46, %cst_39 {dimension_numbers = #tpu.dot_dimension_numbers<[1], [0], [0], [1], [0, 0, 1, 1], [], []>} : vector<16x128xf32>, vector<128x128xf32>, vector<16x128xf32> -> vector<16x128xf32>
    %c0_40 = arith.constant 0 : index
    %c0_41 = arith.constant 0 : index
    %48 = vector.load %arg16[%c0_40, %c0_41] : memref<1x128xf32, #tpu.memory_space<vmem>>, vector<1x128xf32>
    %49 = vector.broadcast %48 : vector<1x128xf32> to vector<16x128xf32>
    %50 = arith.addf %47, %49 : vector<16x128xf32>
    %51 = arith.addf %50, %32 : vector<16x128xf32>
    %c0_42 = arith.constant 0 : index
    %c0_43 = arith.constant 0 : index
    %52 = vector.load %arg17[%c0_42, %c0_43] : memref<16x128xf32, #tpu.memory_space<vmem>>, vector<16x128xf32>
    tpu.vector_store %arg17[%c0_42, %c0_43], %51 {strides = array<i32>} : memref<16x128xf32, #tpu.memory_space<vmem>>, vector<16x128xf32>,
    return
  }
  func.func @transform_0(%arg0: i32) -> (i32, i32) {
    %c0_i32 = arith.constant 0 : i32
    %c0_i32_0 = arith.constant 0 : i32
    return %arg0, %c0_i32 : i32, i32
  }
  func.func @transform_1(%arg0: i32) -> (i32, i32) {
    %c0_i32 = arith.constant 0 : i32
    %c0_i32_0 = arith.constant 0 : i32
    %c0_i32_1 = arith.constant 0 : i32
    return %c0_i32, %c0_i32_0 : i32, i32
  }
  func.func @transform_2(%arg0: i32) -> (i32, i32) {
    %c0_i32 = arith.constant 0 : i32
    %c0_i32_0 = arith.constant 0 : i32
    %c0_i32_1 = arith.constant 0 : i32
    return %c0_i32, %c0_i32_0 : i32, i32
  }
  func.func @transform_3(%arg0: i32) -> (i32, i32) {
    %c0_i32 = arith.constant 0 : i32
    %c0_i32_0 = arith.constant 0 : i32
    %c0_i32_1 = arith.constant 0 : i32
    return %c0_i32, %c0_i32_0 : i32, i32
  }
  func.func @transform_4(%arg0: i32) -> (i32, i32) {
    %c0_i32 = arith.constant 0 : i32
    %c0_i32_0 = arith.constant 0 : i32
    %c0_i32_1 = arith.constant 0 : i32
    return %c0_i32, %c0_i32_0 : i32, i32
  }
  func.func @transform_5(%arg0: i32) -> (i32, i32) {
    %c0_i32 = arith.constant 0 : i32
    %c0_i32_0 = arith.constant 0 : i32
    %c0_i32_1 = arith.constant 0 : i32
    return %c0_i32, %c0_i32_0 : i32, i32
  }
  func.func @transform_6(%arg0: i32) -> (i32, i32) {
    %c0_i32 = arith.constant 0 : i32
    %c0_i32_0 = arith.constant 0 : i32
    %c0_i32_1 = arith.constant 0 : i32
    return %c0_i32, %c0_i32_0 : i32, i32
  }
  func.func @transform_7(%arg0: i32) -> (i32, i32) {
    %c0_i32 = arith.constant 0 : i32
    %c0_i32_0 = arith.constant 0 : i32
    %c0_i32_1 = arith.constant 0 : i32
    return %c0_i32, %c0_i32_0 : i32, i32
  }
  func.func @transform_8(%arg0: i32) -> (i32, i32) {
    %c0_i32 = arith.constant 0 : i32
    %c0_i32_0 = arith.constant 0 : i32
    %c0_i32_1 = arith.constant 0 : i32
    return %c0_i32, %c0_i32_0 : i32, i32
  }
  func.func @transform_9(%arg0: i32) -> (i32, i32) {
    %c0_i32 = arith.constant 0 : i32
    %c0_i32_0 = arith.constant 0 : i32
    %c0_i32_1 = arith.constant 0 : i32
    return %c0_i32, %c0_i32_0 : i32, i32
  }
  func.func @transform_10(%arg0: i32) -> (i32, i32) {
    %c0_i32 = arith.constant 0 : i32
    %c0_i32_0 = arith.constant 0 : i32
    %c0_i32_1 = arith.constant 0 : i32
    return %c0_i32, %c0_i32_0 : i32, i32
  }
  func.func @transform_11(%arg0: i32) -> (i32, i32) {
    %c0_i32 = arith.constant 0 : i32
    %c0_i32_0 = arith.constant 0 : i32
    %c0_i32_1 = arith.constant 0 : i32
    return %c0_i32, %c0_i32_0 : i32, i32
  }
  func.func @transform_12(%arg0: i32) -> (i32, i32) {
    %c0_i32 = arith.constant 0 : i32
    %c0_i32_0 = arith.constant 0 : i32
    %c0_i32_1 = arith.constant 0 : i32
    return %c0_i32, %c0_i32_0 : i32, i32
  }
  func.func @transform_13(%arg0: i32) -> (i32, i32) {
    %c0_i32 = arith.constant 0 : i32
    %c0_i32_0 = arith.constant 0 : i32
    %c0_i32_1 = arith.constant 0 : i32
    return %c0_i32, %c0_i32_0 : i32, i32
  }
  func.func @transform_14(%arg0: i32) -> (i32, i32) {
    %c0_i32 = arith.constant 0 : i32
    %c0_i32_0 = arith.constant 0 : i32
    %c0_i32_1 = arith.constant 0 : i32
    return %c0_i32, %c0_i32_0 : i32, i32
  }
  func.func @transform_15(%arg0: i32) -> (i32, i32) {
    %c0_i32 = arith.constant 0 : i32
    %c0_i32_0 = arith.constant 0 : i32
    %c0_i32_1 = arith.constant 0 : i32
    return %c0_i32, %c0_i32_0 : i32, i32
  }
  func.func @transform_16(%arg0: i32) -> (i32, i32) {
    %c0_i32 = arith.constant 0 : i32
    %c0_i32_0 = arith.constant 0 : i32
    return %arg0, %c0_i32 : i32, i32
  }
}

</mosaic_0001>

<llo_original>
// kernel: forward.1
$region0: #{forward.1}
  #allocation0 [shape = 'u32[]', space=smem, size = 0x4, offset = 0x4, fixed_abs, tag = 'smem constant byte address 0x4 - core index']
  #allocation1 [shape = 'u32[144,128]{1,0:T(1,128)}', space=vmem, size = 0x12000, scoped, tag = 'internal scratch']
  %s0 = inlined_call_operand.vmem [shape: f32[16,128], index: 0, kind: input, shape index: {}]
  %s1 = inlined_call_operand.vmem [shape: f32[1,128], index: 1, kind: input, shape index: {}]
  %s2 = inlined_call_operand.vmem [shape: f32[1,128], index: 2, kind: input, shape index: {}]
  %s3 = inlined_call_operand.vmem [shape: f32[128,128], index: 3, kind: input, shape index: {}]
  %s4 = inlined_call_operand.vmem [shape: f32[1,128], index: 4, kind: input, shape index: {}]
  %s5 = inlined_call_operand.hbm [shape: f32[128,128], index: 5, kind: input, shape index: {}]
  %s6 = inlined_call_operand.hbm [shape: f32[128,128], index: 6, kind: input, shape index: {}]
  %s7 = inlined_call_operand.vmem [shape: f32[1,128], index: 7, kind: input, shape index: {}]
  %s8 = inlined_call_operand.hbm [shape: f32[128,128], index: 8, kind: input, shape index: {}]
  %s9 = inlined_call_operand.vmem [shape: f32[1,128], index: 9, kind: input, shape index: {}]
  %s10 = inlined_call_operand.hbm [shape: f32[128,128], index: 10, kind: input, shape index: {}]
  %s11 = inlined_call_operand.hbm [shape: f32[128,128], index: 11, kind: input, shape index: {}]
  %s12 = inlined_call_operand.hbm [shape: f32[128,128], index: 12, kind: input, shape index: {}]
  %s13 = inlined_call_operand.vmem [shape: f32[1,128], index: 13, kind: input, shape index: {}]
  %s14 = inlined_call_operand.hbm [shape: f32[128,128], index: 14, kind: input, shape index: {}]
  %s15 = inlined_call_operand.vmem [shape: f32[1,128], index: 15, kind: input, shape index: {}]
  %s16 = inlined_call_operand.vmem [shape: f32[16,128], index: 16, kind: output, shape index: {}]
  %s17 = sld [smem:[#allocation0]]
  $region102: #{forward.1} parent=0
    _
  %s19 = ssub.s32 1, %s17
  %s20 = scalar_select 0, %s19, %s17
  $region1: #{forward.1} parent=0
    #allocation2 [shape = 'u8[65536]{0}', space=vmem, size = 0x10000, scoped, tag = 'input window, operand 5, single buffered']
    #allocation3 [shape = 's32[1]{0}', space=sflag, size = 0x4, scoped, tag = 'scoped memory for forward.1']
    #allocation4 [shape = 'u8[65536]{0}', space=vmem, size = 0x10000, scoped, tag = 'input window, operand 6, single buffered']
    #allocation5 [shape = 's32[1]{0}', space=sflag, size = 0x4, scoped, tag = 'scoped memory for forward.1']
    #allocation6 [shape = 'u8[65536]{0}', space=vmem, size = 0x10000, scoped, tag = 'input window, operand 8, single buffered']
    #allocation7 [shape = 'u8[65536]{0}', space=vmem, size = 0x10000, scoped, tag = 'input window, operand 10, single buffered']
    #allocation8 [shape = 's32[1]{0}', space=sflag, size = 0x4, scoped, tag = 'scoped memory for forward.1']
    #allocation9 [shape = 'u8[65536]{0}', space=vmem, size = 0x10000, scoped, tag = 'input window, operand 11, single buffered']
    #allocation10 [shape = 'u8[65536]{0}', space=vmem, size = 0x10000, scoped, tag = 'input window, operand 12, single buffered']
    #allocation11 [shape = 's32[1]{0}', space=sflag, size = 0x4, scoped, tag = 'scoped memory for forward.1']
    #allocation12 [shape = 'u8[65536]{0}', space=vmem, size = 0x10000, scoped, tag = 'input window, operand 14, single buffered']
    %21 = vsyncpa [#allocation3], 0
    %22 = vsyncpa [#allocation5], 0
    %23 = vsyncpa [#allocation8], 0
    %24 = vsyncpa [#allocation11], 0
    // Predicated region
    $region2: #{forward.1} parent=1 // pred_check
      _
    $region3: #{forward.1} parent=1 // pred_check_branch
      %26 = sbr.rel (0) target = $region5
    $region4: #{forward.1} parent=1 // pred_region
      _
    $region5: #{forward.1} parent=1 // pred_fallthru
      _
    // Predicated region
    $region6: #{forward.1} parent=1 // pred_check
      _
    $region7: #{forward.1} parent=1 // pred_check_branch
      %28 = sbr.rel (0) target = $region9
    $region8: #{forward.1} parent=1 // pred_region
      _
    $region9: #{forward.1} parent=1 // pred_fallthru
      _
    // Predicated region
    $region10: #{forward.1} parent=1 // pred_check
      _
    $region11: #{forward.1} parent=1 // pred_check_branch
      %30 = sbr.rel (0) target = $region13
    $region12: #{forward.1} parent=1 // pred_region
      _
    $region13: #{forward.1} parent=1 // pred_fallthru
      _
    // Predicated region
    $region14: #{forward.1} parent=1 // pred_check
      _
    $region15: #{forward.1} parent=1 // pred_check_branch
      %32 = sbr.rel (0) target = $region17
    $region16: #{forward.1} parent=1 // pred_region
      _
    $region17: #{forward.1} parent=1 // pred_fallthru
      _
    // Predicated region
    $region18: #{forward.1} parent=1 // pred_check
      _
    $region19: #{forward.1} parent=1 // pred_check_branch
      %34 = sbr.rel (0) target = $region21
    $region20: #{forward.1} parent=1 // pred_region
      _
    $region21: #{forward.1} parent=1 // pred_fallthru
      _
    // Predicated region
    $region22: #{forward.1} parent=1 // pred_check
      _
    $region23: #{forward.1} parent=1 // pred_check_branch
      %36 = sbr.rel (0) target = $region25
    $region24: #{forward.1} parent=1 // pred_region
      %s38 = ssub.s32 2048, 2048
      %39 = vsyncadd [#allocation3], %s38
      %s40 = sshll.u32 [#allocation2], 4
      %s41 = int_to_ptr.vmem [resolvable:$true] %s40
      %46 = dma.hbm_to_vmem [thread:$0]  %s5, 2048, %s41, [#allocation3], 128, 128, 8
    $region25: #{forward.1} parent=1 // pred_fallthru
      _
    // Predicated region
    $region26: #{forward.1} parent=1 // pred_check
      _
    $region27: #{forward.1} parent=1 // pred_check_branch
      %48 = sbr.rel (0) target = $region29
    $region28: #{forward.1} parent=1 // pred_region
      %s50 = ssub.s32 2048, 2048
      %51 = vsyncadd [#allocation5], %s50
      %s52 = sshll.u32 [#allocation4], 4
      %s53 = int_to_ptr.vmem [resolvable:$true] %s52
      %58 = dma.hbm_to_vmem [thread:$0]  %s6, 2048, %s53, [#allocation5], 128, 128, 8
    $region29: #{forward.1} parent=1 // pred_fallthru
      _
    // Predicated region
    $region30: #{forward.1} parent=1 // pred_check
      _
    $region31: #{forward.1} parent=1 // pred_check_branch
      %60 = sbr.rel (0) target = $region33
    $region32: #{forward.1} parent=1 // pred_region
      _
    $region33: #{forward.1} parent=1 // pred_fallthru
      _
    // Predicated region
    $region34: #{forward.1} parent=1 // pred_check
      _
    $region35: #{forward.1} parent=1 // pred_check_branch
      %62 = sbr.rel (0) target = $region37
    $region36: #{forward.1} parent=1 // pred_region
      %s64 = ssub.s32 2048, 2048
      %65 = vsyncadd [#allocation5], %s64
      %s66 = sshll.u32 [#allocation6], 4
      %s67 = int_to_ptr.vmem [resolvable:$true] %s66
      %72 = dma.hbm_to_vmem [thread:$0]  %s8, 2048, %s67, [#allocation5], 128, 128, 8
    $region37: #{forward.1} parent=1 // pred_fallthru
      _
    // Predicated region
    $region38: #{forward.1} parent=1 // pred_check
      _
    $region39: #{forward.1} parent=1 // pred_check_branch
      %74 = sbr.rel (0) target = $region41
    $region40: #{forward.1} parent=1 // pred_region
      _
    $region41: #{forward.1} parent=1 // pred_fallthru
      _
    // Predicated region
    $region42: #{forward.1} parent=1 // pred_check
      _
    $region43: #{forward.1} parent=1 // pred_check_branch
      %76 = sbr.rel (0) target = $region45
    $region44: #{forward.1} parent=1 // pred_region
      %s78 = ssub.s32 2048, 2048
      %79 = vsyncadd [#allocation8], %s78
      %s80 = sshll.u32 [#allocation7], 4
      %s81 = int_to_ptr.vmem [resolvable:$true] %s80
      %86 = dma.hbm_to_vmem [thread:$0]  %s10, 2048, %s81, [#allocation8], 128, 128, 8
    $region45: #{forward.1} parent=1 // pred_fallthru
      _
    // Predicated region
    $region46: #{forward.1} parent=1 // pred_check
      _
    $region47: #{forward.1} parent=1 // pred_check_branch
      %88 = sbr.rel (0) target = $region49
    $region48: #{forward.1} parent=1 // pred_region
      %s90 = ssub.s32 2048, 2048
      %91 = vsyncadd [#allocation8], %s90
      %s92 = sshll.u32 [#allocation9], 4
      %s93 = int_to_ptr.vmem [resolvable:$true] %s92
      %98 = dma.hbm_to_vmem [thread:$0]  %s11, 2048, %s93, [#allocation8], 128, 128, 8
    $region49: #{forward.1} parent=1 // pred_fallthru
      _
    // Predicated region
    $region50: #{forward.1} parent=1 // pred_check
      _
    $region51: #{forward.1} parent=1 // pred_check_branch
      %100 = sbr.rel (0) target = $region53
    $region52: #{forward.1} parent=1 // pred_region
      %s102 = ssub.s32 2048, 2048
      %103 = vsyncadd [#allocation11], %s102
      %s104 = sshll.u32 [#allocation10], 4
      %s105 = int_to_ptr.vmem [resolvable:$true] %s104
      %110 = dma.hbm_to_vmem [thread:$0]  %s12, 2048, %s105, [#allocation11], 128, 128, 8
    $region53: #{forward.1} parent=1 // pred_fallthru
      _
    // Predicated region
    $region54: #{forward.1} parent=1 // pred_check
      _
    $region55: #{forward.1} parent=1 // pred_check_branch
      %112 = sbr.rel (0) target = $region57
    $region56: #{forward.1} parent=1 // pred_region
      _
    $region57: #{forward.1} parent=1 // pred_fallthru
      _
    // Predicated region
    $region58: #{forward.1} parent=1 // pred_check
      _
    $region59: #{forward.1} parent=1 // pred_check_branch
      %114 = sbr.rel (0) target = $region61
    $region60: #{forward.1} parent=1 // pred_region
      %s116 = ssub.s32 2048, 2048
      %117 = vsyncadd [#allocation11], %s116
      %s118 = sshll.u32 [#allocation12], 4
      %s119 = int_to_ptr.vmem [resolvable:$true] %s118
      %124 = dma.hbm_to_vmem [thread:$0]  %s14, 2048, %s119, [#allocation11], 128, 128, 8
    $region61: #{forward.1} parent=1 // pred_fallthru
      _
    // Predicated region
    $region62: #{forward.1} parent=1 // pred_check
      _
    $region63: #{forward.1} parent=1 // pred_check_branch
      %126 = sbr.rel (0) target = $region65
    $region64: #{forward.1} parent=1 // pred_region
      _
    $region65: #{forward.1} parent=1 // pred_fallthru
      _
    // Predicated region
    $region66: #{forward.1} parent=1 // pred_check
      _
    $region67: #{forward.1} parent=1 // pred_check_branch
      %128 = sbr.rel (0) target = $region69
    $region68: #{forward.1} parent=1 // pred_region
      %129 = dma.done [#allocation3], 2048
    $region69: #{forward.1} parent=1 // pred_fallthru
      _
    // Predicated region
    $region70: #{forward.1} parent=1 // pred_check
      _
    $region71: #{forward.1} parent=1 // pred_check_branch
      %131 = sbr.rel (0) target = $region73
    $region72: #{forward.1} parent=1 // pred_region
      %132 = dma.done [#allocation5], 2048
    $region73: #{forward.1} parent=1 // pred_fallthru
      _
    // Predicated region
    $region74: #{forward.1} parent=1 // pred_check
      _
    $region75: #{forward.1} parent=1 // pred_check_branch
      %134 = sbr.rel (0) target = $region77
    $region76: #{forward.1} parent=1 // pred_region
      %135 = dma.done [#allocation5], 2048
    $region77: #{forward.1} parent=1 // pred_fallthru
      _
    // Predicated region
    $region78: #{forward.1} parent=1 // pred_check
      _
    $region79: #{forward.1} parent=1 // pred_check_branch
      %137 = sbr.rel (0) target = $region81
    $region80: #{forward.1} parent=1 // pred_region
      %138 = dma.done [#allocation8], 2048
    $region81: #{forward.1} parent=1 // pred_fallthru
      _
    // Predicated region
    $region82: #{forward.1} parent=1 // pred_check
      _
    $region83: #{forward.1} parent=1 // pred_check_branch
      %140 = sbr.rel (0) target = $region85
    $region84: #{forward.1} parent=1 // pred_region
      %141 = dma.done [#allocation8], 2048
    $region85: #{forward.1} parent=1 // pred_fallthru
      _
    // Predicated region
    $region86: #{forward.1} parent=1 // pred_check
      _
    $region87: #{forward.1} parent=1 // pred_check_branch
      %143 = sbr.rel (0) target = $region89
    $region88: #{forward.1} parent=1 // pred_region
      %144 = dma.done [#allocation11], 2048
    $region89: #{forward.1} parent=1 // pred_fallthru
      _
    // Predicated region
    $region90: #{forward.1} parent=1 // pred_check
      _
    $region91: #{forward.1} parent=1 // pred_check_branch
      %146 = sbr.rel (0) target = $region93
    $region92: #{forward.1} parent=1 // pred_region
      %147 = dma.done [#allocation11], 2048
    $region93: #{forward.1} parent=1 // pred_fallthru
      _
    %v148 = vld [vmem:[%s0] sm:$0xff]
    %v149 = vld [vmem:[%s0 + $0x8] sm:$0xff]
    %v150 = vld [vmem:[%s1] sm:$0x1]
    %152 = vset.pattern.permute.xlu0 10
    %153 = vperm.xlu0 %152, %v148
    %v154 = vpop.permute.xlu0 %153
    %157 = vset.pattern.permute.xlu0 10
    %158 = vperm.xlu0 %157, %v149
    %v159 = vpop.permute.xlu0 %158
    %v162 = vlaneseq
    %v163 = vshrl.u32 %v162, 7
    %v164 = vsub.s32 0, %v163
    %v165 = vrot.slane %v150, %v164
    %v167 = vmul.f32 %v154, %v165
    %v168 = vmul.f32 %v159, %v165
    %v169 = vld [vmem:[%s2] sm:$0x1]
    %v171 = vlaneseq
    %v172 = vshrl.u32 %v171, 7
    %v173 = vsub.s32 0, %v172
    %v174 = vrot.slane %v169, %v173
    %v176 = vadd.f32 %v167, %v174
    %v177 = vadd.f32 %v168, %v174
    %v178 = vmax.f32 %v176, 0.0
    %v179 = vmax.f32 %v177, 0.0
    %v180 = vld [vmem:[%s3] sm:$0xff]
    %v181 = vld [vmem:[%s3 + $0x8] sm:$0xff]
    %v182 = vld [vmem:[%s3 + $0x10] sm:$0xff]
    %v183 = vld [vmem:[%s3 + $0x18] sm:$0xff]
    %v184 = vld [vmem:[%s3 + $0x20] sm:$0xff]
    %v185 = vld [vmem:[%s3 + $0x28] sm:$0xff]
    %v186 = vld [vmem:[%s3 + $0x30] sm:$0xff]
    %v187 = vld [vmem:[%s3 + $0x38] sm:$0xff]
    %v188 = vld [vmem:[%s3 + $0x40] sm:$0xff]
    %v189 = vld [vmem:[%s3 + $0x48] sm:$0xff]
    %v190 = vld [vmem:[%s3 + $0x50] sm:$0xff]
    %v191 = vld [vmem:[%s3 + $0x58] sm:$0xff]
    %v192 = vld [vmem:[%s3 + $0x60] sm:$0xff]
    %v193 = vld [vmem:[%s3 + $0x68] sm:$0xff]
    %v194 = vld [vmem:[%s3 + $0x70] sm:$0xff]
    %v195 = vld [vmem:[%s3 + $0x78] sm:$0xff]
    %v196 = vld [vmem:[%s4] sm:$0x1]
    %v198 = vlaneseq
    %v199 = vshrl.u32 %v198, 7
    %v200 = vsub.s32 0, %v199
    %v201 = vrot.slane %v196, %v200
    %203 = vmatprep.subr.mxu0 0.0
    %204 = vmatpush1.msra.mxu0 %v180
    %205 = vmatprep.subr.mxu0 0.0
    %206 = vmatpush1.msra.mxu0 %v181
    %207 = vmatprep.subr.mxu0 0.0
    %208 = vmatpush1.msra.mxu0 %v182
    %209 = vmatprep.subr.mxu0 0.0
    %210 = vmatpush1.msra.mxu0 %v183
    %211 = vmatprep.subr.mxu0 0.0
    %212 = vmatpush1.msra.mxu0 %v184
    %213 = vmatprep.subr.mxu0 0.0
    %214 = vmatpush1.msra.mxu0 %v185
    %215 = vmatprep.subr.mxu0 0.0
    %216 = vmatpush1.msra.mxu0 %v186
    %217 = vmatprep.subr.mxu0 0.0
    %218 = vmatpush1.msra.mxu0 %v187
    %219 = vmatprep.subr.mxu0 0.0
    %220 = vmatpush1.msra.mxu0 %v188
    %221 = vmatprep.subr.mxu0 0.0
    %222 = vmatpush1.msra.mxu0 %v189
    %223 = vmatprep.subr.mxu0 0.0
    %224 = vmatpush1.msra.mxu0 %v190
    %225 = vmatprep.subr.mxu0 0.0
    %226 = vmatpush1.msra.mxu0 %v191
    %227 = vmatprep.subr.mxu0 0.0
    %228 = vmatpush1.msra.mxu0 %v192
    %229 = vmatprep.subr.mxu0 0.0
    %230 = vmatpush1.msra.mxu0 %v193
    %231 = vmatprep.subr.mxu0 0.0
    %232 = vmatpush1.msra.mxu0 %v194
    %233 = vmatprep.subr.mxu0 0.0
    %234 = vmatpush1.msra.mxu0 %v195
    %235 = vmatprep.subr.mxu0 0.0
    %236 = vmatpush1.msra.mxu0 0.0
    %237 = vmatprep.subr.mxu0 0.0
    %238 = vmatpush1.msra.mxu0 0.0
    %239 = vmatprep.subr.mxu0 0.0
    %240 = vmatpush1.msra.mxu0 0.0
    %241 = vmatprep.subr.mxu0 0.0
    %242 = vmatpush1.msra.mxu0 0.0
    %243 = vmatprep.subr.mxu0 0.0
    %244 = vmatpush1.msra.mxu0 0.0
    %245 = vmatprep.subr.mxu0 0.0
    %246 = vmatpush1.msra.mxu0 0.0
    %247 = vmatprep.subr.mxu0 0.0
    %248 = vmatpush1.msra.mxu0 0.0
    %249 = vmatprep.subr.mxu0 0.0
    %250 = vmatpush1.msra.mxu0 0.0
    %251 = vmatprep.subr.mxu0 0.0
    %252 = vmatpush1.msra.mxu0 0.0
    %253 = vmatprep.subr.mxu0 0.0
    %254 = vmatpush1.msra.mxu0 0.0
    %255 = vmatprep.subr.mxu0 0.0
    %256 = vmatpush1.msra.mxu0 0.0
    %257 = vmatprep.subr.mxu0 0.0
    %258 = vmatpush1.msra.mxu0 0.0
    %259 = vmatprep.subr.mxu0 0.0
    %260 = vmatpush1.msra.mxu0 0.0
    %261 = vmatprep.subr.mxu0 0.0
    %262 = vmatpush1.msra.mxu0 0.0
    %263 = vmatprep.subr.mxu0 0.0
    %264 = vmatpush1.msra.mxu0 0.0
    %265 = vmatprep.subr.mxu0 0.0
    %266 = vmatpush1.msra.mxu0 0.0
    %267 = vmatprep.mubr.f32.mxu0 0.0
    %268 = vmatmul.mubr.f32.gmra.mrb[0].mxu0 %v178
    %v269 = vpop.f32.mrb[0].mxu0
    %v270 = vadd.f32 %v201, %v269
    %v271 = vpop.f32.mrb[0].mxu0
    %272 = vmatprep.mubr.f32.mxu0 0.0
    %273 = vmatmul.mubr.f32.gmra.mrb[0].mxu0 %v179
    %v274 = vpop.f32.mrb[0].mxu0
    %v275 = vadd.f32 %v201, %v274
    %v276 = vpop.f32.mrb[0].mxu0
    %277 = vdwg.mxu0
    %v278 = vld [vmem:[#allocation2] sm:$0xff]
    %v279 = vld [vmem:[#allocation2 + $0x8] sm:$0xff]
    %v280 = vld [vmem:[#allocation2 + $0x10] sm:$0xff]
    %v281 = vld [vmem:[#allocation2 + $0x18] sm:$0xff]
    %v282 = vld [vmem:[#allocation2 + $0x20] sm:$0xff]
    %v283 = vld [vmem:[#allocation2 + $0x28] sm:$0xff]
    %v284 = vld [vmem:[#allocation2 + $0x30] sm:$0xff]
    %v285 = vld [vmem:[#allocation2 + $0x38] sm:$0xff]
    %v286 = vld [vmem:[#allocation2 + $0x40] sm:$0xff]
    %v287 = vld [vmem:[#allocation2 + $0x48] sm:$0xff]
    %v288 = vld [vmem:[#allocation2 + $0x50] sm:$0xff]
    %v289 = vld [vmem:[#allocation2 + $0x58] sm:$0xff]
    %v290 = vld [vmem:[#allocation2 + $0x60] sm:$0xff]
    %v291 = vld [vmem:[#allocation2 + $0x68] sm:$0xff]
    %v292 = vld [vmem:[#allocation2 + $0x70] sm:$0xff]
    %v293 = vld [vmem:[#allocation2 + $0x78] sm:$0xff]
    %v294 = vld [vmem:[#allocation4] sm:$0xff]
    %v295 = vld [vmem:[#allocation4 + $0x8] sm:$0xff]
    %v296 = vld [vmem:[#allocation4 + $0x10] sm:$0xff]
    %v297 = vld [vmem:[#allocation4 + $0x18] sm:$0xff]
    %v298 = vld [vmem:[#allocation4 + $0x20] sm:$0xff]
    %v299 = vld [vmem:[#allocation4 + $0x28] sm:$0xff]
    %v300 = vld [vmem:[#allocation4 + $0x30] sm:$0xff]
    %v301 = vld [vmem:[#allocation4 + $0x38] sm:$0xff]
    %v302 = vld [vmem:[#allocation4 + $0x40] sm:$0xff]
    %v303 = vld [vmem:[#allocation4 + $0x48] sm:$0xff]
    %v304 = vld [vmem:[#allocation4 + $0x50] sm:$0xff]
    %v305 = vld [vmem:[#allocation4 + $0x58] sm:$0xff]
    %v306 = vld [vmem:[#allocation4 + $0x60] sm:$0xff]
    %v307 = vld [vmem:[#allocation4 + $0x68] sm:$0xff]
    %v308 = vld [vmem:[#allocation4 + $0x70] sm:$0xff]
    %v309 = vld [vmem:[#allocation4 + $0x78] sm:$0xff]
    %310 = vmatprep.subr.mxu0 0.0
    %311 = vmatpush1.msra.mxu0 %v294
    %312 = vmatprep.subr.mxu0 0.0
    %313 = vmatpush1.msra.mxu0 %v295
    %314 = vmatprep.subr.mxu0 0.0
    %315 = vmatpush1.msra.mxu0 %v296
    %316 = vmatprep.subr.mxu0 0.0
    %317 = vmatpush1.msra.mxu0 %v297
    %318 = vmatprep.subr.mxu0 0.0
    %319 = vmatpush1.msra.mxu0 %v298
    %320 = vmatprep.subr.mxu0 0.0
    %321 = vmatpush1.msra.mxu0 %v299
    %322 = vmatprep.subr.mxu0 0.0
    %323 = vmatpush1.msra.mxu0 %v300
    %324 = vmatprep.subr.mxu0 0.0
    %325 = vmatpush1.msra.mxu0 %v301
    %326 = vmatprep.subr.mxu0 0.0
    %327 = vmatpush1.msra.mxu0 %v302
    %328 = vmatprep.subr.mxu0 0.0
    %329 = vmatpush1.msra.mxu0 %v303
    %330 = vmatprep.subr.mxu0 0.0
    %331 = vmatpush1.msra.mxu0 %v304
    %332 = vmatprep.subr.mxu0 0.0
    %333 = vmatpush1.msra.mxu0 %v305
    %334 = vmatprep.subr.mxu0 0.0
    %335 = vmatpush1.msra.mxu0 %v306
    %336 = vmatprep.subr.mxu0 0.0
    %337 = vmatpush1.msra.mxu0 %v307
    %338 = vmatprep.subr.mxu0 0.0
    %339 = vmatpush1.msra.mxu0 %v308
    %340 = vmatprep.subr.mxu0 0.0
    %341 = vmatpush1.msra.mxu0 %v309
    %342 = vmatprep.subr.mxu0 0.0
    %343 = vmatpush1.msra.mxu0 0.0
    %344 = vmatprep.subr.mxu0 0.0
    %345 = vmatpush1.msra.mxu0 0.0
    %346 = vmatprep.subr.mxu0 0.0
    %347 = vmatpush1.msra.mxu0 0.0
    %348 = vmatprep.subr.mxu0 0.0
    %349 = vmatpush1.msra.mxu0 0.0
    %350 = vmatprep.subr.mxu0 0.0
    %351 = vmatpush1.msra.mxu0 0.0
    %352 = vmatprep.subr.mxu0 0.0
    %353 = vmatpush1.msra.mxu0 0.0
    %354 = vmatprep.subr.mxu0 0.0
    %355 = vmatpush1.msra.mxu0 0.0
    %356 = vmatprep.subr.mxu0 0.0
    %357 = vmatpush1.msra.mxu0 0.0
    %358 = vmatprep.subr.mxu0 0.0
    %359 = vmatpush1.msra.mxu0 0.0
    %360 = vmatprep.subr.mxu0 0.0
    %361 = vmatpush1.msra.mxu0 0.0
    %362 = vmatprep.subr.mxu0 0.0
    %363 = vmatpush1.msra.mxu0 0.0
    %364 = vmatprep.subr.mxu0 0.0
    %365 = vmatpush1.msra.mxu0 0.0
    %366 = vmatprep.subr.mxu0 0.0
    %367 = vmatpush1.msra.mxu0 0.0
    %368 = vmatprep.subr.mxu0 0.0
    %369 = vmatpush1.msra.mxu0 0.0
    %370 = vmatprep.subr.mxu0 0.0
    %371 = vmatpush1.msra.mxu0 0.0
    %372 = vmatprep.subr.mxu0 0.0
    %373 = vmatpush1.msra.mxu0 0.0
    %374 = vmatprep.mubr.f32.mxu0 0.0
    %375 = vmatmul.mubr.f32.gmra.mrb[0].mxu0 %v270
    %v376 = vpop.f32.mrb[0].mxu0
    %v377 = vadd.f32 0.0, %v376
    %v378 = vpop.f32.mrb[0].mxu0
    %379 = vmatprep.mubr.f32.mxu0 0.0
    %380 = vmatmul.mubr.f32.gmra.mrb[0].mxu0 %v275
    %v381 = vpop.f32.mrb[0].mxu0
    %v382 = vadd.f32 0.0, %v381
    %v383 = vpop.f32.mrb[0].mxu0
    %384 = vdwg.mxu0
    %385 = vmatprep.subr.mxu0 0.0
    %386 = vmatpush1.msra.mxu0 %v278
    %387 = vmatprep.subr.mxu0 0.0
    %388 = vmatpush1.msra.mxu0 %v279
    %389 = vmatprep.subr.mxu0 0.0
    %390 = vmatpush1.msra.mxu0 %v280
    %391 = vmatprep.subr.mxu0 0.0
    %392 = vmatpush1.msra.mxu0 %v281
    %393 = vmatprep.subr.mxu0 0.0
    %394 = vmatpush1.msra.mxu0 %v282
    %395 = vmatprep.subr.mxu0 0.0
    %396 = vmatpush1.msra.mxu0 %v283
    %397 = vmatprep.subr.mxu0 0.0
    %398 = vmatpush1.msra.mxu0 %v284
    %399 = vmatprep.subr.mxu0 0.0
    %400 = vmatpush1.msra.mxu0 %v285
    %401 = vmatprep.subr.mxu0 0.0
    %402 = vmatpush1.msra.mxu0 %v286
    %403 = vmatprep.subr.mxu0 0.0
    %404 = vmatpush1.msra.mxu0 %v287
    %405 = vmatprep.subr.mxu0 0.0
    %406 = vmatpush1.msra.mxu0 %v288
    %407 = vmatprep.subr.mxu0 0.0
    %408 = vmatpush1.msra.mxu0 %v289
    %409 = vmatprep.subr.mxu0 0.0
    %410 = vmatpush1.msra.mxu0 %v290
    %411 = vmatprep.subr.mxu0 0.0
    %412 = vmatpush1.msra.mxu0 %v291
    %413 = vmatprep.subr.mxu0 0.0
    %414 = vmatpush1.msra.mxu0 %v292
    %415 = vmatprep.subr.mxu0 0.0
    %416 = vmatpush1.msra.mxu0 %v293
    %417 = vmatprep.subr.mxu0 0.0
    %418 = vmatpush1.msra.mxu0 0.0
    %419 = vmatprep.subr.mxu0 0.0
    %420 = vmatpush1.msra.mxu0 0.0
    %421 = vmatprep.subr.mxu0 0.0
    %422 = vmatpush1.msra.mxu0 0.0
    %423 = vmatprep.subr.mxu0 0.0
    %424 = vmatpush1.msra.mxu0 0.0
    %425 = vmatprep.subr.mxu0 0.0
    %426 = vmatpush1.msra.mxu0 0.0
    %427 = vmatprep.subr.mxu0 0.0
    %428 = vmatpush1.msra.mxu0 0.0
    %429 = vmatprep.subr.mxu0 0.0
    %430 = vmatpush1.msra.mxu0 0.0
    %431 = vmatprep.subr.mxu0 0.0
    %432 = vmatpush1.msra.mxu0 0.0
    %433 = vmatprep.subr.mxu0 0.0
    %434 = vmatpush1.msra.mxu0 0.0
    %435 = vmatprep.subr.mxu0 0.0
    %436 = vmatpush1.msra.mxu0 0.0
    %437 = vmatprep.subr.mxu0 0.0
    %438 = vmatpush1.msra.mxu0 0.0
    %439 = vmatprep.subr.mxu0 0.0
    %440 = vmatpush1.msra.mxu0 0.0
    %441 = vmatprep.subr.mxu0 0.0
    %442 = vmatpush1.msra.mxu0 0.0
    %443 = vmatprep.subr.mxu0 0.0
    %444 = vmatpush1.msra.mxu0 0.0
    %445 = vmatprep.subr.mxu0 0.0
    %446 = vmatpush1.msra.mxu0 0.0
    %447 = vmatprep.subr.mxu0 0.0
    %448 = vmatpush1.msra.mxu0 0.0
    %449 = vmatprep.mubr.f32.mxu0 0.0
    %450 = vmatmul.mubr.f32.gmra.mrb[0].mxu0 %v148
    %v451 = vpop.f32.mrb[0].mxu0
    %v452 = vadd.f32 %v377, %v451
    %v453 = vpop.f32.mrb[0].mxu0
    %454 = vmatprep.mubr.f32.mxu0 0.0
    %455 = vmatmul.mubr.f32.gmra.mrb[0].mxu0 %v149
    %v456 = vpop.f32.mrb[0].mxu0
    %v457 = vadd.f32 %v382, %v456
    %v458 = vpop.f32.mrb[0].mxu0
    %459 = vdwg.mxu0
    %v460 = vld [vmem:[%s7] sm:$0x1]
    %v462 = vlaneseq
    %v463 = vshrl.u32 %v462, 7
    %v464 = vsub.s32 0, %v463
    %v465 = vrot.slane %v460, %v464
    %v467 = vadd.f32 %v452, %v465
    %v468 = vadd.f32 %v457, %v465
    %v469 = vmax.f32 %v467, 0.0
    %v470 = vmax.f32 %v468, 0.0
    %v471 = vld [vmem:[#allocation6] sm:$0xff]
    %v472 = vld [vmem:[#allocation6 + $0x8] sm:$0xff]
    %v473 = vld [vmem:[#allocation6 + $0x10] sm:$0xff]
    %v474 = vld [vmem:[#allocation6 + $0x18] sm:$0xff]
    %v475 = vld [vmem:[#allocation6 + $0x20] sm:$0xff]
    %v476 = vld [vmem:[#allocation6 + $0x28] sm:$0xff]
    %v477 = vld [vmem:[#allocation6 + $0x30] sm:$0xff]
    %v478 = vld [vmem:[#allocation6 + $0x38] sm:$0xff]
    %v479 = vld [vmem:[#allocation6 + $0x40] sm:$0xff]
    %v480 = vld [vmem:[#allocation6 + $0x48] sm:$0xff]
    %v481 = vld [vmem:[#allocation6 + $0x50] sm:$0xff]
    %v482 = vld [vmem:[#allocation6 + $0x58] sm:$0xff]
    %v483 = vld [vmem:[#allocation6 + $0x60] sm:$0xff]
    %v484 = vld [vmem:[#allocation6 + $0x68] sm:$0xff]
    %v485 = vld [vmem:[#allocation6 + $0x70] sm:$0xff]
    %v486 = vld [vmem:[#allocation6 + $0x78] sm:$0xff]
    %v487 = vld [vmem:[%s9] sm:$0x1]
    %v489 = vlaneseq
    %v490 = vshrl.u32 %v489, 7
    %v491 = vsub.s32 0, %v490
    %v492 = vrot.slane %v487, %v491
    %494 = vmatprep.subr.mxu0 0.0
    %495 = vmatpush1.msra.mxu0 %v471
    %496 = vmatprep.subr.mxu0 0.0
    %497 = vmatpush1.msra.mxu0 %v472
    %498 = vmatprep.subr.mxu0 0.0
    %499 = vmatpush1.msra.mxu0 %v473
    %500 = vmatprep.subr.mxu0 0.0
    %501 = vmatpush1.msra.mxu0 %v474
    %502 = vmatprep.subr.mxu0 0.0
    %503 = vmatpush1.msra.mxu0 %v475
    %504 = vmatprep.subr.mxu0 0.0
    %505 = vmatpush1.msra.mxu0 %v476
    %506 = vmatprep.subr.mxu0 0.0
    %507 = vmatpush1.msra.mxu0 %v477
    %508 = vmatprep.subr.mxu0 0.0
    %509 = vmatpush1.msra.mxu0 %v478
    %510 = vmatprep.subr.mxu0 0.0
    %511 = vmatpush1.msra.mxu0 %v479
    %512 = vmatprep.subr.mxu0 0.0
    %513 = vmatpush1.msra.mxu0 %v480
    %514 = vmatprep.subr.mxu0 0.0
    %515 = vmatpush1.msra.mxu0 %v481
    %516 = vmatprep.subr.mxu0 0.0
    %517 = vmatpush1.msra.mxu0 %v482
    %518 = vmatprep.subr.mxu0 0.0
    %519 = vmatpush1.msra.mxu0 %v483
    %520 = vmatprep.subr.mxu0 0.0
    %521 = vmatpush1.msra.mxu0 %v484
    %522 = vmatprep.subr.mxu0 0.0
    %523 = vmatpush1.msra.mxu0 %v485
    %524 = vmatprep.subr.mxu0 0.0
    %525 = vmatpush1.msra.mxu0 %v486
    %526 = vmatprep.subr.mxu0 0.0
    %527 = vmatpush1.msra.mxu0 0.0
    %528 = vmatprep.subr.mxu0 0.0
    %529 = vmatpush1.msra.mxu0 0.0
    %530 = vmatprep.subr.mxu0 0.0
    %531 = vmatpush1.msra.mxu0 0.0
    %532 = vmatprep.subr.mxu0 0.0
    %533 = vmatpush1.msra.mxu0 0.0
    %534 = vmatprep.subr.mxu0 0.0
    %535 = vmatpush1.msra.mxu0 0.0
    %536 = vmatprep.subr.mxu0 0.0
    %537 = vmatpush1.msra.mxu0 0.0
    %538 = vmatprep.subr.mxu0 0.0
    %539 = vmatpush1.msra.mxu0 0.0
    %540 = vmatprep.subr.mxu0 0.0
    %541 = vmatpush1.msra.mxu0 0.0
    %542 = vmatprep.subr.mxu0 0.0
    %543 = vmatpush1.msra.mxu0 0.0
    %544 = vmatprep.subr.mxu0 0.0
    %545 = vmatpush1.msra.mxu0 0.0
    %546 = vmatprep.subr.mxu0 0.0
    %547 = vmatpush1.msra.mxu0 0.0
    %548 = vmatprep.subr.mxu0 0.0
    %549 = vmatpush1.msra.mxu0 0.0
    %550 = vmatprep.subr.mxu0 0.0
    %551 = vmatpush1.msra.mxu0 0.0
    %552 = vmatprep.subr.mxu0 0.0
    %553 = vmatpush1.msra.mxu0 0.0
    %554 = vmatprep.subr.mxu0 0.0
    %555 = vmatpush1.msra.mxu0 0.0
    %556 = vmatprep.subr.mxu0 0.0
    %557 = vmatpush1.msra.mxu0 0.0
    %558 = vmatprep.mubr.f32.mxu0 0.0
    %559 = vmatmul.mubr.f32.gmra.mrb[0].mxu0 %v469
    %v560 = vpop.f32.mrb[0].mxu0
    %v561 = vadd.f32 %v492, %v560
    %v562 = vpop.f32.mrb[0].mxu0
    %563 = vmatprep.mubr.f32.mxu0 0.0
    %564 = vmatmul.mubr.f32.gmra.mrb[0].mxu0 %v470
    %v565 = vpop.f32.mrb[0].mxu0
    %v566 = vadd.f32 %v492, %v565
    %v567 = vpop.f32.mrb[0].mxu0
    %568 = vdwg.mxu0
    %v569 = vmax.f32 %v561, 0.0
    %v570 = vmax.f32 %v566, 0.0
    %v571 = vld [vmem:[#allocation7] sm:$0xff]
    %v572 = vld [vmem:[#allocation7 + $0x8] sm:$0xff]
    %v573 = vld [vmem:[#allocation7 + $0x10] sm:$0xff]
    %v574 = vld [vmem:[#allocation7 + $0x18] sm:$0xff]
    %v575 = vld [vmem:[#allocation7 + $0x20] sm:$0xff]
    %v576 = vld [vmem:[#allocation7 + $0x28] sm:$0xff]
    %v577 = vld [vmem:[#allocation7 + $0x30] sm:$0xff]
    %v578 = vld [vmem:[#allocation7 + $0x38] sm:$0xff]
    %v579 = vld [vmem:[#allocation7 + $0x40] sm:$0xff]
    %v580 = vld [vmem:[#allocation7 + $0x48] sm:$0xff]
    %v581 = vld [vmem:[#allocation7 + $0x50] sm:$0xff]
    %v582 = vld [vmem:[#allocation7 + $0x58] sm:$0xff]
    %v583 = vld [vmem:[#allocation7 + $0x60] sm:$0xff]
    %v584 = vld [vmem:[#allocation7 + $0x68] sm:$0xff]
    %v585 = vld [vmem:[#allocation7 + $0x70] sm:$0xff]
    %v586 = vld [vmem:[#allocation7 + $0x78] sm:$0xff]
    %v587 = vld [vmem:[#allocation9] sm:$0xff]
    %v588 = vld [vmem:[#allocation9 + $0x8] sm:$0xff]
    %v589 = vld [vmem:[#allocation9 + $0x10] sm:$0xff]
    %v590 = vld [vmem:[#allocation9 + $0x18] sm:$0xff]
    %v591 = vld [vmem:[#allocation9 + $0x20] sm:$0xff]
    %v592 = vld [vmem:[#allocation9 + $0x28] sm:$0xff]
    %v593 = vld [vmem:[#allocation9 + $0x30] sm:$0xff]
    %v594 = vld [vmem:[#allocation9 + $0x38] sm:$0xff]
    %v595 = vld [vmem:[#allocation9 + $0x40] sm:$0xff]
    %v596 = vld [vmem:[#allocation9 + $0x48] sm:$0xff]
    %v597 = vld [vmem:[#allocation9 + $0x50] sm:$0xff]
    %v598 = vld [vmem:[#allocation9 + $0x58] sm:$0xff]
    %v599 = vld [vmem:[#allocation9 + $0x60] sm:$0xff]
    %v600 = vld [vmem:[#allocation9 + $0x68] sm:$0xff]
    %v601 = vld [vmem:[#allocation9 + $0x70] sm:$0xff]
    %v602 = vld [vmem:[#allocation9 + $0x78] sm:$0xff]
    %603 = vmatprep.subr.mxu0 0.0
    %604 = vmatpush1.msra.mxu0 %v587
    %605 = vmatprep.subr.mxu0 0.0
    %606 = vmatpush1.msra.mxu0 %v588
    %607 = vmatprep.subr.mxu0 0.0
    %608 = vmatpush1.msra.mxu0 %v589
    %609 = vmatprep.subr.mxu0 0.0
    %610 = vmatpush1.msra.mxu0 %v590
    %611 = vmatprep.subr.mxu0 0.0
    %612 = vmatpush1.msra.mxu0 %v591
    %613 = vmatprep.subr.mxu0 0.0
    %614 = vmatpush1.msra.mxu0 %v592
    %615 = vmatprep.subr.mxu0 0.0
    %616 = vmatpush1.msra.mxu0 %v593
    %617 = vmatprep.subr.mxu0 0.0
    %618 = vmatpush1.msra.mxu0 %v594
    %619 = vmatprep.subr.mxu0 0.0
    %620 = vmatpush1.msra.mxu0 %v595
    %621 = vmatprep.subr.mxu0 0.0
    %622 = vmatpush1.msra.mxu0 %v596
    %623 = vmatprep.subr.mxu0 0.0
    %624 = vmatpush1.msra.mxu0 %v597
    %625 = vmatprep.subr.mxu0 0.0
    %626 = vmatpush1.msra.mxu0 %v598
    %627 = vmatprep.subr.mxu0 0.0
    %628 = vmatpush1.msra.mxu0 %v599
    %629 = vmatprep.subr.mxu0 0.0
    %630 = vmatpush1.msra.mxu0 %v600
    %631 = vmatprep.subr.mxu0 0.0
    %632 = vmatpush1.msra.mxu0 %v601
    %633 = vmatprep.subr.mxu0 0.0
    %634 = vmatpush1.msra.mxu0 %v602
    %635 = vmatprep.subr.mxu0 0.0
    %636 = vmatpush1.msra.mxu0 0.0
    %637 = vmatprep.subr.mxu0 0.0
    %638 = vmatpush1.msra.mxu0 0.0
    %639 = vmatprep.subr.mxu0 0.0
    %640 = vmatpush1.msra.mxu0 0.0
    %641 = vmatprep.subr.mxu0 0.0
    %642 = vmatpush1.msra.mxu0 0.0
    %643 = vmatprep.subr.mxu0 0.0
    %644 = vmatpush1.msra.mxu0 0.0
    %645 = vmatprep.subr.mxu0 0.0
    %646 = vmatpush1.msra.mxu0 0.0
    %647 = vmatprep.subr.mxu0 0.0
    %648 = vmatpush1.msra.mxu0 0.0
    %649 = vmatprep.subr.mxu0 0.0
    %650 = vmatpush1.msra.mxu0 0.0
    %651 = vmatprep.subr.mxu0 0.0
    %652 = vmatpush1.msra.mxu0 0.0
    %653 = vmatprep.subr.mxu0 0.0
    %654 = vmatpush1.msra.mxu0 0.0
    %655 = vmatprep.subr.mxu0 0.0
    %656 = vmatpush1.msra.mxu0 0.0
    %657 = vmatprep.subr.mxu0 0.0
    %658 = vmatpush1.msra.mxu0 0.0
    %659 = vmatprep.subr.mxu0 0.0
    %660 = vmatpush1.msra.mxu0 0.0
    %661 = vmatprep.subr.mxu0 0.0
    %662 = vmatpush1.msra.mxu0 0.0
    %663 = vmatprep.subr.mxu0 0.0
    %664 = vmatpush1.msra.mxu0 0.0
    %665 = vmatprep.subr.mxu0 0.0
    %666 = vmatpush1.msra.mxu0 0.0
    %667 = vmatprep.mubr.f32.mxu0 0.0
    %668 = vmatmul.mubr.f32.gmra.mrb[0].mxu0 %v148
    %v669 = vpop.f32.mrb[0].mxu0
    %v670 = vadd.f32 0.0, %v669
    %v671 = vpop.f32.mrb[0].mxu0
    %672 = vmatprep.mubr.f32.mxu0 0.0
    %673 = vmatmul.mubr.f32.gmra.mrb[0].mxu0 %v149
    %v674 = vpop.f32.mrb[0].mxu0
    %v675 = vadd.f32 0.0, %v674
    %v676 = vpop.f32.mrb[0].mxu0
    %677 = vdwg.mxu0
    %678 = vmatprep.subr.mxu0 0.0
    %679 = vmatpush1.msra.mxu0 %v571
    %680 = vmatprep.subr.mxu0 0.0
    %681 = vmatpush1.msra.mxu0 %v572
    %682 = vmatprep.subr.mxu0 0.0
    %683 = vmatpush1.msra.mxu0 %v573
    %684 = vmatprep.subr.mxu0 0.0
    %685 = vmatpush1.msra.mxu0 %v574
    %686 = vmatprep.subr.mxu0 0.0
    %687 = vmatpush1.msra.mxu0 %v575
    %688 = vmatprep.subr.mxu0 0.0
    %689 = vmatpush1.msra.mxu0 %v576
    %690 = vmatprep.subr.mxu0 0.0
    %691 = vmatpush1.msra.mxu0 %v577
    %692 = vmatprep.subr.mxu0 0.0
    %693 = vmatpush1.msra.mxu0 %v578
    %694 = vmatprep.subr.mxu0 0.0
    %695 = vmatpush1.msra.mxu0 %v579
    %696 = vmatprep.subr.mxu0 0.0
    %697 = vmatpush1.msra.mxu0 %v580
    %698 = vmatprep.subr.mxu0 0.0
    %699 = vmatpush1.msra.mxu0 %v581
    %700 = vmatprep.subr.mxu0 0.0
    %701 = vmatpush1.msra.mxu0 %v582
    %702 = vmatprep.subr.mxu0 0.0
    %703 = vmatpush1.msra.mxu0 %v583
    %704 = vmatprep.subr.mxu0 0.0
    %705 = vmatpush1.msra.mxu0 %v584
    %706 = vmatprep.subr.mxu0 0.0
    %707 = vmatpush1.msra.mxu0 %v585
    %708 = vmatprep.subr.mxu0 0.0
    %709 = vmatpush1.msra.mxu0 %v586
    %710 = vmatprep.subr.mxu0 0.0
    %711 = vmatpush1.msra.mxu0 0.0
    %712 = vmatprep.subr.mxu0 0.0
    %713 = vmatpush1.msra.mxu0 0.0
    %714 = vmatprep.subr.mxu0 0.0
    %715 = vmatpush1.msra.mxu0 0.0
    %716 = vmatprep.subr.mxu0 0.0
    %717 = vmatpush1.msra.mxu0 0.0
    %718 = vmatprep.subr.mxu0 0.0
    %719 = vmatpush1.msra.mxu0 0.0
    %720 = vmatprep.subr.mxu0 0.0
    %721 = vmatpush1.msra.mxu0 0.0
    %722 = vmatprep.subr.mxu0 0.0
    %723 = vmatpush1.msra.mxu0 0.0
    %724 = vmatprep.subr.mxu0 0.0
    %725 = vmatpush1.msra.mxu0 0.0
    %726 = vmatprep.subr.mxu0 0.0
    %727 = vmatpush1.msra.mxu0 0.0
    %728 = vmatprep.subr.mxu0 0.0
    %729 = vmatpush1.msra.mxu0 0.0
    %730 = vmatprep.subr.mxu0 0.0
    %731 = vmatpush1.msra.mxu0 0.0
    %732 = vmatprep.subr.mxu0 0.0
    %733 = vmatpush1.msra.mxu0 0.0
    %734 = vmatprep.subr.mxu0 0.0
    %735 = vmatpush1.msra.mxu0 0.0
    %736 = vmatprep.subr.mxu0 0.0
    %737 = vmatpush1.msra.mxu0 0.0
    %738 = vmatprep.subr.mxu0 0.0
    %739 = vmatpush1.msra.mxu0 0.0
    %740 = vmatprep.subr.mxu0 0.0
    %741 = vmatpush1.msra.mxu0 0.0
    %742 = vmatprep.mubr.f32.mxu0 0.0
    %743 = vmatmul.mubr.f32.gmra.mrb[0].mxu0 %v569
    %v744 = vpop.f32.mrb[0].mxu0
    %v745 = vadd.f32 %v670, %v744
    %v746 = vpop.f32.mrb[0].mxu0
    %747 = vmatprep.mubr.f32.mxu0 0.0
    %748 = vmatmul.mubr.f32.gmra.mrb[0].mxu0 %v570
    %v749 = vpop.f32.mrb[0].mxu0
    %v750 = vadd.f32 %v675, %v749
    %v751 = vpop.f32.mrb[0].mxu0
    %752 = vdwg.mxu0
    %v753 = vld [vmem:[#allocation10] sm:$0xff]
    %v754 = vld [vmem:[#allocation10 + $0x8] sm:$0xff]
    %v755 = vld [vmem:[#allocation10 + $0x10] sm:$0xff]
    %v756 = vld [vmem:[#allocation10 + $0x18] sm:$0xff]
    %v757 = vld [vmem:[#allocation10 + $0x20] sm:$0xff]
    %v758 = vld [vmem:[#allocation10 + $0x28] sm:$0xff]
    %v759 = vld [vmem:[#allocation10 + $0x30] sm:$0xff]
    %v760 = vld [vmem:[#allocation10 + $0x38] sm:$0xff]
    %v761 = vld [vmem:[#allocation10 + $0x40] sm:$0xff]
    %v762 = vld [vmem:[#allocation10 + $0x48] sm:$0xff]
    %v763 = vld [vmem:[#allocation10 + $0x50] sm:$0xff]
    %v764 = vld [vmem:[#allocation10 + $0x58] sm:$0xff]
    %v765 = vld [vmem:[#allocation10 + $0x60] sm:$0xff]
    %v766 = vld [vmem:[#allocation10 + $0x68] sm:$0xff]
    %v767 = vld [vmem:[#allocation10 + $0x70] sm:$0xff]
    %v768 = vld [vmem:[#allocation10 + $0x78] sm:$0xff]
    %769 = vmatprep.subr.mxu0 0.0
    %770 = vmatpush1.msra.mxu0 %v753
    %771 = vmatprep.subr.mxu0 0.0
    %772 = vmatpush1.msra.mxu0 %v754
    %773 = vmatprep.subr.mxu0 0.0
    %774 = vmatpush1.msra.mxu0 %v755
    %775 = vmatprep.subr.mxu0 0.0
    %776 = vmatpush1.msra.mxu0 %v756
    %777 = vmatprep.subr.mxu0 0.0
    %778 = vmatpush1.msra.mxu0 %v757
    %779 = vmatprep.subr.mxu0 0.0
    %780 = vmatpush1.msra.mxu0 %v758
    %781 = vmatprep.subr.mxu0 0.0
    %782 = vmatpush1.msra.mxu0 %v759
    %783 = vmatprep.subr.mxu0 0.0
    %784 = vmatpush1.msra.mxu0 %v760
    %785 = vmatprep.subr.mxu0 0.0
    %786 = vmatpush1.msra.mxu0 %v761
    %787 = vmatprep.subr.mxu0 0.0
    %788 = vmatpush1.msra.mxu0 %v762
    %789 = vmatprep.subr.mxu0 0.0
    %790 = vmatpush1.msra.mxu0 %v763
    %791 = vmatprep.subr.mxu0 0.0
    %792 = vmatpush1.msra.mxu0 %v764
    %793 = vmatprep.subr.mxu0 0.0
    %794 = vmatpush1.msra.mxu0 %v765
    %795 = vmatprep.subr.mxu0 0.0
    %796 = vmatpush1.msra.mxu0 %v766
    %797 = vmatprep.subr.mxu0 0.0
    %798 = vmatpush1.msra.mxu0 %v767
    %799 = vmatprep.subr.mxu0 0.0
    %800 = vmatpush1.msra.mxu0 %v768
    %801 = vmatprep.subr.mxu0 0.0
    %802 = vmatpush1.msra.mxu0 0.0
    %803 = vmatprep.subr.mxu0 0.0
    %804 = vmatpush1.msra.mxu0 0.0
    %805 = vmatprep.subr.mxu0 0.0
    %806 = vmatpush1.msra.mxu0 0.0
    %807 = vmatprep.subr.mxu0 0.0
    %808 = vmatpush1.msra.mxu0 0.0
    %809 = vmatprep.subr.mxu0 0.0
    %810 = vmatpush1.msra.mxu0 0.0
    %811 = vmatprep.subr.mxu0 0.0
    %812 = vmatpush1.msra.mxu0 0.0
    %813 = vmatprep.subr.mxu0 0.0
    %814 = vmatpush1.msra.mxu0 0.0
    %815 = vmatprep.subr.mxu0 0.0
    %816 = vmatpush1.msra.mxu0 0.0
    %817 = vmatprep.subr.mxu0 0.0
    %818 = vmatpush1.msra.mxu0 0.0
    %819 = vmatprep.subr.mxu0 0.0
    %820 = vmatpush1.msra.mxu0 0.0
    %821 = vmatprep.subr.mxu0 0.0
    %822 = vmatpush1.msra.mxu0 0.0
    %823 = vmatprep.subr.mxu0 0.0
    %824 = vmatpush1.msra.mxu0 0.0
    %825 = vmatprep.subr.mxu0 0.0
    %826 = vmatpush1.msra.mxu0 0.0
    %827 = vmatprep.subr.mxu0 0.0
    %828 = vmatpush1.msra.mxu0 0.0
    %829 = vmatprep.subr.mxu0 0.0
    %830 = vmatpush1.msra.mxu0 0.0
    %831 = vmatprep.subr.mxu0 0.0
    %832 = vmatpush1.msra.mxu0 0.0
    %833 = vmatprep.mubr.f32.mxu0 0.0
    %834 = vmatmul.mubr.f32.gmra.mrb[0].mxu0 %v270
    %v835 = vpop.f32.mrb[0].mxu0
    %v836 = vadd.f32 0.0, %v835
    %v837 = vpop.f32.mrb[0].mxu0
    %838 = vmatprep.mubr.f32.mxu0 0.0
    %839 = vmatmul.mubr.f32.gmra.mrb[0].mxu0 %v275
    %v840 = vpop.f32.mrb[0].mxu0
    %v841 = vadd.f32 0.0, %v840
    %v842 = vpop.f32.mrb[0].mxu0
    %843 = vdwg.mxu0
    %v844 = vadd.f32 %v745, %v836
    %v845 = vadd.f32 %v750, %v841
    %v846 = vld [vmem:[%s13] sm:$0x1]
    %v848 = vlaneseq
    %v849 = vshrl.u32 %v848, 7
    %v850 = vsub.s32 0, %v849
    %v851 = vrot.slane %v846, %v850
    %v853 = vadd.f32 %v844, %v851
    %v854 = vadd.f32 %v845, %v851
    %v855 = vmax.f32 %v853, 0.0
    %v856 = vmax.f32 %v854, 0.0
    %v857 = vld [vmem:[#allocation12] sm:$0xff]
    %v858 = vld [vmem:[#allocation12 + $0x8] sm:$0xff]
    %v859 = vld [vmem:[#allocation12 + $0x10] sm:$0xff]
    %v860 = vld [vmem:[#allocation12 + $0x18] sm:$0xff]
    %v861 = vld [vmem:[#allocation12 + $0x20] sm:$0xff]
    %v862 = vld [vmem:[#allocation12 + $0x28] sm:$0xff]
    %v863 = vld [vmem:[#allocation12 + $0x30] sm:$0xff]
    %v864 = vld [vmem:[#allocation12 + $0x38] sm:$0xff]
    %v865 = vld [vmem:[#allocation12 + $0x40] sm:$0xff]
    %v866 = vld [vmem:[#allocation12 + $0x48] sm:$0xff]
    %v867 = vld [vmem:[#allocation12 + $0x50] sm:$0xff]
    %v868 = vld [vmem:[#allocation12 + $0x58] sm:$0xff]
    %v869 = vld [vmem:[#allocation12 + $0x60] sm:$0xff]
    %v870 = vld [vmem:[#allocation12 + $0x68] sm:$0xff]
    %v871 = vld [vmem:[#allocation12 + $0x70] sm:$0xff]
    %v872 = vld [vmem:[#allocation12 + $0x78] sm:$0xff]
    %v873 = vld [vmem:[%s15] sm:$0x1]
    %v875 = vlaneseq
    %v876 = vshrl.u32 %v875, 7
    %v877 = vsub.s32 0, %v876
    %v878 = vrot.slane %v873, %v877
    %880 = vmatprep.subr.mxu0 0.0
    %881 = vmatpush1.msra.mxu0 %v857
    %882 = vmatprep.subr.mxu0 0.0
    %883 = vmatpush1.msra.mxu0 %v858
    %884 = vmatprep.subr.mxu0 0.0
    %885 = vmatpush1.msra.mxu0 %v859
    %886 = vmatprep.subr.mxu0 0.0
    %887 = vmatpush1.msra.mxu0 %v860
    %888 = vmatprep.subr.mxu0 0.0
    %889 = vmatpush1.msra.mxu0 %v861
    %890 = vmatprep.subr.mxu0 0.0
    %891 = vmatpush1.msra.mxu0 %v862
    %892 = vmatprep.subr.mxu0 0.0
    %893 = vmatpush1.msra.mxu0 %v863
    %894 = vmatprep.subr.mxu0 0.0
    %895 = vmatpush1.msra.mxu0 %v864
    %896 = vmatprep.subr.mxu0 0.0
    %897 = vmatpush1.msra.mxu0 %v865
    %898 = vmatprep.subr.mxu0 0.0
    %899 = vmatpush1.msra.mxu0 %v866
    %900 = vmatprep.subr.mxu0 0.0
    %901 = vmatpush1.msra.mxu0 %v867
    %902 = vmatprep.subr.mxu0 0.0
    %903 = vmatpush1.msra.mxu0 %v868
    %904 = vmatprep.subr.mxu0 0.0
    %905 = vmatpush1.msra.mxu0 %v869
    %906 = vmatprep.subr.mxu0 0.0
    %907 = vmatpush1.msra.mxu0 %v870
    %908 = vmatprep.subr.mxu0 0.0
    %909 = vmatpush1.msra.mxu0 %v871
    %910 = vmatprep.subr.mxu0 0.0
    %911 = vmatpush1.msra.mxu0 %v872
    %912 = vmatprep.subr.mxu0 0.0
    %913 = vmatpush1.msra.mxu0 0.0
    %914 = vmatprep.subr.mxu0 0.0
    %915 = vmatpush1.msra.mxu0 0.0
    %916 = vmatprep.subr.mxu0 0.0
    %917 = vmatpush1.msra.mxu0 0.0
    %918 = vmatprep.subr.mxu0 0.0
    %919 = vmatpush1.msra.mxu0 0.0
    %920 = vmatprep.subr.mxu0 0.0
    %921 = vmatpush1.msra.mxu0 0.0
    %922 = vmatprep.subr.mxu0 0.0
    %923 = vmatpush1.msra.mxu0 0.0
    %924 = vmatprep.subr.mxu0 0.0
    %925 = vmatpush1.msra.mxu0 0.0
    %926 = vmatprep.subr.mxu0 0.0
    %927 = vmatpush1.msra.mxu0 0.0
    %928 = vmatprep.subr.mxu0 0.0
    %929 = vmatpush1.msra.mxu0 0.0
    %930 = vmatprep.subr.mxu0 0.0
    %931 = vmatpush1.msra.mxu0 0.0
    %932 = vmatprep.subr.mxu0 0.0
    %933 = vmatpush1.msra.mxu0 0.0
    %934 = vmatprep.subr.mxu0 0.0
    %935 = vmatpush1.msra.mxu0 0.0
    %936 = vmatprep.subr.mxu0 0.0
    %937 = vmatpush1.msra.mxu0 0.0
    %938 = vmatprep.subr.mxu0 0.0
    %939 = vmatpush1.msra.mxu0 0.0
    %940 = vmatprep.subr.mxu0 0.0
    %941 = vmatpush1.msra.mxu0 0.0
    %942 = vmatprep.subr.mxu0 0.0
    %943 = vmatpush1.msra.mxu0 0.0
    %944 = vmatprep.mubr.f32.mxu0 0.0
    %945 = vmatmul.mubr.f32.gmra.mrb[0].mxu0 %v855
    %v946 = vpop.f32.mrb[0].mxu0
    %v947 = vadd.f32 %v878, %v946
    %v948 = vpop.f32.mrb[0].mxu0
    %949 = vmatprep.mubr.f32.mxu0 0.0
    %950 = vmatmul.mubr.f32.gmra.mrb[0].mxu0 %v856
    %v951 = vpop.f32.mrb[0].mxu0
    %v952 = vadd.f32 %v878, %v951
    %v953 = vpop.f32.mrb[0].mxu0
    %954 = vdwg.mxu0
    %v955 = vadd.f32 %v947, %v569
    %v956 = vadd.f32 %v952, %v570
    %957 = vst [vmem:[%s16] sm:$0xff] %v955
    %958 = vst [vmem:[%s16 + $0x8] sm:$0xff] %v956
    // Predicated region
    $region94: #{forward.1} parent=1 // pred_check
      _
    $region95: #{forward.1} parent=1 // pred_check_branch
      %960 = sbr.rel (0) target = $region97
    $region96: #{forward.1} parent=1 // pred_region
      _
    $region97: #{forward.1} parent=1 // pred_fallthru
      _
    // Predicated region
    $region98: #{forward.1} parent=1 // pred_check
      _
    $region99: #{forward.1} parent=1 // pred_check_branch
      %962 = sbr.rel (0) target = $region101
    $region100: #{forward.1} parent=1 // pred_region
      _
    $region101: #{forward.1} parent=1 // pred_fallthru
      _
    %963 = vsyncpa [#allocation3], 1
    %964 = vsyncpa [#allocation5], 1
    %965 = vsyncpa [#allocation8], 1
    %966 = vsyncpa [#allocation11], 1

</llo_original>
